<compile_context>
chip_gen: v6e
topology: v6e:2x2x1
jax: 0.10.0
libtpu: 0.0.40
codegen_flags: <defaults>
</compile_context>

<pallas_src>
import jax
import jax.numpy as jnp
from jax.experimental import pallas as pl
from jax.experimental.pallas import tpu as pltpu

MBEDDING_DIM = 128   # hidden width from the reference module
VOCAB_SIZE = 64      # synthetic vocab size (len(vocab) in the reference)
EMBEDDING_DIM = 32   # embedding_dim passed to CBOW.__init__
CONTEXT_SIZE = 4     # number of context word indices per example
BATCH = 256          # number of context windows processed per call
NEG_INF = -1e30      # bias for padded vocab lanes (exp() underflows to 0)


def cbow_kernel(idx_ref, ew_ref, b1_ref, w2_ref, b2_ref, out_ref):
    # idx_ref : VMEM (TM, C) int32   -- context word indices for TM examples
    # ew_ref  : VMEM (Vp, H)         -- pre-folded emb @ W1 (vocab padded to Vp)
    # b1_ref  : VMEM (1, H)  f32
    # w2_ref  : VMEM (H, Vp)
    # b2_ref  : VMEM (1, Vp) f32     -- padded lanes hold NEG_INF
    # out_ref : VMEM (TM, Vp) f32    -- log-softmax output block
    tm, n_ctx = idx_ref.shape
    vp = ew_ref.shape[0]

    # counts[b, v] = multiplicity of vocab id v in example b's context.
    # Built with lane-dense VPU compares; the gather+sum then becomes one
    # MXU matmul: (sum of context embeddings) @ W1 == counts @ (emb @ W1).
    idx = idx_ref[...]                                              # (TM, C)
    lane = jax.lax.broadcasted_iota(jnp.int32, (tm, vp), 1)         # (TM, Vp)
    counts = jnp.zeros((tm, vp), jnp.float32)
    for c in range(n_ctx):                                          # static, tiny
        counts = counts + (idx[:, c:c + 1] == lane).astype(jnp.float32)

    h = jnp.dot(counts.astype(ew_ref.dtype), ew_ref[...],
                preferred_element_type=jnp.float32) + b1_ref[...]
    h = jnp.maximum(h, 0.0)                                         # ReLU (f32)

    logits = jnp.dot(h.astype(w2_ref.dtype), w2_ref[...],
                     preferred_element_type=jnp.float32) + b2_ref[...]

    # LogSoftmax(dim=-1), numerically stable, f32 throughout (exp/log on EUP).
    m = jnp.max(logits, axis=-1, keepdims=True)
    shifted = logits - m
    lse = jnp.log(jnp.sum(jnp.exp(shifted), axis=-1, keepdims=True))
    out_ref[...] = shifted - lse


def cbow_forward(indices, emb, w1, b1, w2, b2, *, block_m=128,
                 param_dtype=jnp.float32):
    """Batched CBOW forward.  indices: (B, C) int32 -> (B, V) f32 log-probs."""
    V, _ = emb.shape
    H = w1.shape[1]
    B, C = indices.shape

    # Shrink the batch block for tiny calls (sublane granule is 8 rows).
    block_m = min(block_m, max(8, pl.cdiv(B, 8) * 8))
    vp = pl.cdiv(V, 128) * 128            # lane-dense (padded) vocab
    bp = pl.cdiv(B, block_m) * block_m    # batch padded to a block multiple

    # Weight-only pre-fold: EW = emb @ W1  (V, H), padded to (Vp, H).
    ew = jnp.dot(emb, w1, precision=jax.lax.Precision.HIGHEST)
    ew_p = jnp.zeros((vp, H), param_dtype).at[:V].set(ew.astype(param_dtype))
    w2_p = jnp.zeros((H, vp), param_dtype).at[:, :V].set(w2.astype(param_dtype))
    b1_2d = b1.reshape(1, H).astype(jnp.float32)
    b2_p = jnp.full((1, vp), NEG_INF, jnp.float32).at[:, :V].set(
        b2.astype(jnp.float32))

    idx_p = jnp.zeros((bp, C), jnp.int32).at[:B].set(indices.astype(jnp.int32))

    grid_spec = pltpu.PrefetchScalarGridSpec(
        num_scalar_prefetch=0,
        grid=(bp // block_m,),
        in_specs=[
            pl.BlockSpec((block_m, C), lambda i: (i, 0)),   # context indices
            pl.BlockSpec((vp, H), lambda i: (0, 0)),        # emb @ W1 (resident)
            pl.BlockSpec((1, H), lambda i: (0, 0)),         # b1      (resident)
            pl.BlockSpec((H, vp), lambda i: (0, 0)),        # W2      (resident)
            pl.BlockSpec((1, vp), lambda i: (0, 0)),        # b2      (resident)
        ],
        out_specs=pl.BlockSpec((block_m, vp), lambda i: (i, 0)),
    )
    out = pl.pallas_call(
        cbow_kernel,
        out_shape=jax.ShapeDtypeStruct((bp, vp), jnp.float32),
        grid_spec=grid_spec,
        compiler_params=pltpu.CompilerParams(
            dimension_semantics=("parallel",)),
    )(idx_p, ew_p, b1_2d, w2_p, b2_p)
    return out[:B, :V]


def cbow_forward_single(indices_1d, emb, w1, b1, w2, b2, **kw):
    """Exactly the PyTorch module's forward: 1-D context -> (1, V) log-probs."""
    return cbow_forward(indices_1d.reshape(1, -1), emb, w1, b1, w2, b2, **kw)


def cbow_reference(indices, emb, w1, b1, w2, b2):
    # Faithful (per-row) replica of the module math in plain JAX.
    embeds = jnp.take(emb, indices, axis=0).sum(axis=1)          # (B, D)
    h = jnp.maximum(
        jnp.dot(embeds, w1, precision=jax.lax.Precision.HIGHEST) + b1, 0.0)
    logits = jnp.dot(h, w2, precision=jax.lax.Precision.HIGHEST) + b2
    return jax.nn.log_softmax(logits, axis=-1)


if __name__ == "__main__":
    key = jax.random.PRNGKey(0)
    k_emb, k_w1, k_b1, k_w2, k_b2, k_idx = jax.random.split(key, 6)

    emb = jax.random.normal(k_emb, (VOCAB_SIZE, EMBEDDING_DIM), jnp.float32) * 0.1
    w1 = jax.random.normal(k_w1, (EMBEDDING_DIM, MBEDDING_DIM), jnp.float32) * 0.1
    b1 = jax.random.normal(k_b1, (MBEDDING_DIM,), jnp.float32) * 0.1
    w2 = jax.random.normal(k_w2, (MBEDDING_DIM, VOCAB_SIZE), jnp.float32) * 0.1
    b2 = jax.random.normal(k_b2, (VOCAB_SIZE,), jnp.float32) * 0.1

    indices = jax.random.randint(
        k_idx, (BATCH, CONTEXT_SIZE), 0, VOCAB_SIZE, jnp.int32)

    ref = cbow_reference(indices, emb, w1, b1, w2, b2)

    # f32 weights (exact path).
    out = cbow_forward(indices, emb, w1, b1, w2, b2)
    out = jax.block_until_ready(out)
    assert out.shape == (BATCH, VOCAB_SIZE)
    assert jnp.allclose(out, ref, atol=1e-4, rtol=1e-4), "f32 mismatch vs reference"

    # bf16 weights (MXU fast path on v6e/v7x), f32 accumulation + f32 softmax.
    out_bf16 = cbow_forward(indices, emb, w1, b1, w2, b2,
                            param_dtype=jnp.bfloat16)
    out_bf16 = jax.block_until_ready(out_bf16)
    assert jnp.allclose(out_bf16, ref, atol=5e-2, rtol=0), "bf16 mismatch vs reference"

    # Single-context path matching the original module's forward() exactly
    # (uses a small 8-row block instead of padding up to 128 rows).
    single = cbow_forward_single(indices[0], emb, w1, b1, w2, b2)
    single = jax.block_until_ready(single)
    assert single.shape == (1, VOCAB_SIZE)
    assert jnp.allclose(single, ref[0:1], atol=1e-4, rtol=1e-4)

    print("KERNEL_OK")
</pallas_src>

<mosaic_0001>
module attributes {stable_mosaic.version = 11 : i64} {
  func.func @cbow_kernel(%arg0: i32, %arg1: memref<128x4xi32, #tpu.memory_space<vmem>>, %arg2: memref<128x128xf32, #tpu.memory_space<vmem>>, %arg3: memref<1x128xf32, #tpu.memory_space<vmem>>, %arg4: memref<128x128xf32, #tpu.memory_space<vmem>>, %arg5: memref<1x128xf32, #tpu.memory_space<vmem>>, %arg6: memref<128x128xf32, #tpu.memory_space<vmem>>) attributes {dimension_semantics = [#tpu.dimension_semantics<parallel>], iteration_bounds = array<i64: 2>, scalar_prefetch = 0 : i64, scratch_operands = 0 : i64, tpu.core_type = #tpu.core_type<tc>, window_params = [{transform_indices = @transform_0, window_bounds = array<i64: 128, 4>}, {pipeline_mode = #tpu.pipeline_mode<synchronous>, transform_indices = @transform_1, window_bounds = array<i64: 128, 128>}, {pipeline_mode = #tpu.pipeline_mode<synchronous>, transform_indices = @transform_2, window_bounds = array<i64: 1, 128>}, {pipeline_mode = #tpu.pipeline_mode<synchronous>, transform_indices = @transform_3, window_bounds = array<i64: 128, 128>}, {pipeline_mode = #tpu.pipeline_mode<synchronous>, transform_indices = @transform_4, window_bounds = array<i64: 1, 128>}, {transform_indices = @transform_5, window_bounds = array<i64: 128, 128>}]} {
    %c0 = arith.constant 0 : index
    %c0_0 = arith.constant 0 : index
    %0 = vector.load %arg1[%c0, %c0_0] : memref<128x4xi32, #tpu.memory_space<vmem>>, vector<128x4xi32>
    %1 = tpu.iota {dimensions = array<i32: 1>} : vector<128x128xi32>
    %cst = arith.constant 0.000000e+00 : f32
    %2 = vector.broadcast %cst : f32 to vector<128x128xf32>
    %3 = vector.extract_strided_slice %0 {offsets = [0, 0], sizes = [128, 1], strides = [1, 1]} : vector<128x4xi32> to vector<128x1xi32>
    %4 = vector.broadcast %3 : vector<128x1xi32> to vector<128x128xi32>
    %5 = arith.cmpi eq, %4, %1 : vector<128x128xi32>
    %6 = arith.extui %5 : vector<128x128xi1> to vector<128x128xi32>
    %7 = arith.sitofp %6 : vector<128x128xi32> to vector<128x128xf32>
    %8 = arith.addf %2, %7 : vector<128x128xf32>
    %9 = vector.extract_strided_slice %0 {offsets = [0, 1], sizes = [128, 1], strides = [1, 1]} : vector<128x4xi32> to vector<128x1xi32>
    %10 = vector.broadcast %9 : vector<128x1xi32> to vector<128x128xi32>
    %11 = arith.cmpi eq, %10, %1 : vector<128x128xi32>
    %12 = arith.extui %11 : vector<128x128xi1> to vector<128x128xi32>
    %13 = arith.sitofp %12 : vector<128x128xi32> to vector<128x128xf32>
    %14 = arith.addf %8, %13 : vector<128x128xf32>
    %15 = vector.extract_strided_slice %0 {offsets = [0, 2], sizes = [128, 1], strides = [1, 1]} : vector<128x4xi32> to vector<128x1xi32>
    %16 = vector.broadcast %15 : vector<128x1xi32> to vector<128x128xi32>
    %17 = arith.cmpi eq, %16, %1 : vector<128x128xi32>
    %18 = arith.extui %17 : vector<128x128xi1> to vector<128x128xi32>
    %19 = arith.sitofp %18 : vector<128x128xi32> to vector<128x128xf32>
    %20 = arith.addf %14, %19 : vector<128x128xf32>
    %21 = vector.extract_strided_slice %0 {offsets = [0, 3], sizes = [128, 1], strides = [1, 1]} : vector<128x4xi32> to vector<128x1xi32>
    %22 = vector.broadcast %21 : vector<128x1xi32> to vector<128x128xi32>
    %23 = arith.cmpi eq, %22, %1 : vector<128x128xi32>
    %24 = arith.extui %23 : vector<128x128xi1> to vector<128x128xi32>
    %25 = arith.sitofp %24 : vector<128x128xi32> to vector<128x128xf32>
    %26 = arith.addf %20, %25 : vector<128x128xf32>
    %c0_1 = arith.constant 0 : index
    %c0_2 = arith.constant 0 : index
    %27 = vector.load %arg2[%c0_1, %c0_2] : memref<128x128xf32, #tpu.memory_space<vmem>>, vector<128x128xf32>
    %cst_3 = arith.constant dense<0.000000e+00> : vector<128x128xf32>
    %28 = tpu.matmul %26, %27, %cst_3 {dimension_numbers = #tpu.dot_dimension_numbers<[1], [0], [0], [1], [0, 0, 1, 1], [], []>} : vector<128x128xf32>, vector<128x128xf32>, vector<128x128xf32> -> vector<128x128xf32>
    %c0_4 = arith.constant 0 : index
    %c0_5 = arith.constant 0 : index
    %29 = vector.load %arg3[%c0_4, %c0_5] : memref<1x128xf32, #tpu.memory_space<vmem>>, vector<1x128xf32>
    %30 = vector.broadcast %29 : vector<1x128xf32> to vector<128x128xf32>
    %31 = arith.addf %28, %30 : vector<128x128xf32>
    %cst_6 = arith.constant 0.000000e+00 : f32
    %32 = vector.broadcast %cst_6 : f32 to vector<128x128xf32>
    %33 = arith.maximumf %31, %32 : vector<128x128xf32>
    %c0_7 = arith.constant 0 : index
    %c0_8 = arith.constant 0 : index
    %34 = vector.load %arg4[%c0_7, %c0_8] : memref<128x128xf32, #tpu.memory_space<vmem>>, vector<128x128xf32>
    %cst_9 = arith.constant dense<0.000000e+00> : vector<128x128xf32>
    %35 = tpu.matmul %33, %34, %cst_9 {dimension_numbers = #tpu.dot_dimension_numbers<[1], [0], [0], [1], [0, 0, 1, 1], [], []>} : vector<128x128xf32>, vector<128x128xf32>, vector<128x128xf32> -> vector<128x128xf32>
    %c0_10 = arith.constant 0 : index
    %c0_11 = arith.constant 0 : index
    %36 = vector.load %arg5[%c0_10, %c0_11] : memref<1x128xf32, #tpu.memory_space<vmem>>, vector<1x128xf32>
    %37 = vector.broadcast %36 : vector<1x128xf32> to vector<128x128xf32>
    %38 = arith.addf %35, %37 : vector<128x128xf32>
    %cst_12 = arith.constant dense<0xFF800000> : vector<128xf32>
    %39 = vector.multi_reduction <maximumf>, %38, %cst_12 [1] : vector<128x128xf32> to vector<128xf32>
    %40 = vector.shape_cast %39 : vector<128xf32> to vector<128x1xf32>
    %41 = vector.broadcast %40 : vector<128x1xf32> to vector<128x128xf32>
    %42 = arith.subf %38, %41 : vector<128x128xf32>
    %43 = math.exp %42 : vector<128x128xf32>
    %cst_13 = arith.constant dense<0.000000e+00> : vector<128xf32>
    %44 = vector.multi_reduction <add>, %43, %cst_13 [1] : vector<128x128xf32> to vector<128xf32>
    %45 = vector.shape_cast %44 : vector<128xf32> to vector<128x1xf32>
    %46 = math.log %45 : vector<128x1xf32>
    %47 = vector.broadcast %46 : vector<128x1xf32> to vector<128x128xf32>
    %48 = arith.subf %42, %47 : vector<128x128xf32>
    %c0_14 = arith.constant 0 : index
    %c0_15 = arith.constant 0 : index
    %49 = vector.load %arg6[%c0_14, %c0_15] : memref<128x128xf32, #tpu.memory_space<vmem>>, vector<128x128xf32>
    tpu.vector_store %arg6[%c0_14, %c0_15], %48 {strides = array<i32>} : memref<128x128xf32, #tpu.memory_space<vmem>>, vector<128x128xf32>,
    return
  }
  func.func @transform_0(%arg0: i32) -> (i32, i32) {
    %c0_i32 = arith.constant 0 : i32
    %c0_i32_0 = arith.constant 0 : i32
    return %arg0, %c0_i32 : i32, i32
  }
  func.func @transform_1(%arg0: i32) -> (i32, i32) {
    %c0_i32 = arith.constant 0 : i32
    %c0_i32_0 = arith.constant 0 : i32
    %c0_i32_1 = arith.constant 0 : i32
    return %c0_i32, %c0_i32_0 : i32, i32
  }
  func.func @transform_2(%arg0: i32) -> (i32, i32) {
    %c0_i32 = arith.constant 0 : i32
    %c0_i32_0 = arith.constant 0 : i32
    %c0_i32_1 = arith.constant 0 : i32
    return %c0_i32, %c0_i32_0 : i32, i32
  }
  func.func @transform_3(%arg0: i32) -> (i32, i32) {
    %c0_i32 = arith.constant 0 : i32
    %c0_i32_0 = arith.constant 0 : i32
    %c0_i32_1 = arith.constant 0 : i32
    return %c0_i32, %c0_i32_0 : i32, i32
  }
  func.func @transform_4(%arg0: i32) -> (i32, i32) {
    %c0_i32 = arith.constant 0 : i32
    %c0_i32_0 = arith.constant 0 : i32
    %c0_i32_1 = arith.constant 0 : i32
    return %c0_i32, %c0_i32_0 : i32, i32
  }
  func.func @transform_5(%arg0: i32) -> (i32, i32) {
    %c0_i32 = arith.constant 0 : i32
    %c0_i32_0 = arith.constant 0 : i32
    return %arg0, %c0_i32 : i32, i32
  }
}

</mosaic_0001>

<llo_original>
// kernel: tpu_custom_call.1
$region0: #{tpu_custom_call.1}
  #allocation0 [shape = 'u32[]', space=smem, size = 0x4, offset = 0x4, fixed_abs, tag = 'smem constant byte address 0x4 - core index']
  #allocation1 [shape = 'u32[144,128]{1,0:T(1,128)}', space=vmem, size = 0x12000, scoped, tag = 'internal scratch']
  %s0 = inlined_call_operand.vmem [shape: s32[256,4], index: 0, kind: input, shape index: {}]
  %s1 = inlined_call_operand.vmem [shape: f32[128,128], index: 1, kind: input, shape index: {}]
  %s2 = inlined_call_operand.vmem [shape: f32[1,128], index: 2, kind: input, shape index: {}]
  %s3 = inlined_call_operand.vmem [shape: f32[128,128], index: 3, kind: input, shape index: {}]
  %s4 = inlined_call_operand.vmem [shape: f32[1,128], index: 4, kind: input, shape index: {}]
  %s5 = inlined_call_operand.hbm [shape: f32[256,128], index: 5, kind: output, shape index: {}]
  %s6 = sld [smem:[#allocation0]]
  $region53: #{tpu_custom_call.1} parent=0
    _
  %s8 = ssub.s32 1, %s6
  %s9 = scalar_select 0, %s8, %s6
  $region1: #{tpu_custom_call.1} parent=0
    #allocation2 [shape = 'u8[131072]{0}', space=vmem, size = 0x20000, scoped, tag = 'output window, operand 0']
    #allocation3 [shape = 's32[2]{0}', space=sflag, size = 0x8, scoped, tag = 'scoped memory for tpu_custom_call.1']
    %10 = vsyncpa [#allocation3], 0
    %s11 = scalar_lea.sflag [#allocation3], 1
    %12 = vsyncpa %s11, 0
    loop: start=0, step=1, limit=4
    $region2: #{tpu_custom_call.1} parent=1 // loop_pre_header
      _
    $region3: #{tpu_custom_call.1} parent=1 // loop_header
      %s14 = sphi 0, %s18
      %p15 = scmp.ge.s32.totalorder %s14, 4
      %s24 = sphi 0, %s26
      %s27 = sphi 0, %s24
      %s28 = sphi 0, %s27
      %s44 = sphi 0, %s28
      %s48 = sphi 0, %s48
      %s50 = sphi 0, %s48
      %s51 = sphi 0, %s50
      %s65 = sphi 0, %s51
      %s69 = sphi 0, %s69
      %s71 = sphi 0, %s69
      %s72 = sphi 0, %s71
      %s86 = sphi 0, %s72
      %s90 = sphi 0, %s90
      %s92 = sphi 0, %s90
      %s93 = sphi 0, %s92
      %s107 = sphi 0, %s93
      %s111 = sphi 0, %s111
      %s113 = sphi 0, %s111
      %s114 = sphi 0, %s113
      %s128 = sphi 0, %s114
      %s134 = sphi 0, %s136
      %s137 = sphi 0, %s134
      %s138 = sphi 0, %s137
      %s154 = sphi 0, %s138
    $region4: #{tpu_custom_call.1} parent=1 // loop_header_branch
      %17 = sbr.rel (%p15) target = $region8
    $region5: #{tpu_custom_call.1} parent=1 // loop_body
      %s19 = ssub.s32 %s14, 1
      %s20 = ssub.s32 %s14, 2
      %s21 = sadd.s32 %s14, 1
      %s22 = ssub.s32 %s14, %s21
      %p23 = scmp.eq.s32.totalorder %s22, 0
      %s25 = sadd.s32 %s24, 1
      %s26 = scalar_select %p23, %s24, %s25
      %p29 = pneg %p23
      %p30 = scmp.eq.s32.totalorder %s14, 1
      %p31 = por %p29, %p30
      %p32 = scmp.ne.s32.totalorder %s24, %s27
      %p33 = scmp.eq.s32.totalorder %s14, 0
      %p34 = por %p32, %p33
      %p35 = scmp.ne.s32.totalorder %s24, %s27
      %p36 = scmp.eq.s32.totalorder %s19, 1
      %p37 = por %p35, %p36
      %p38 = scmp.ne.s32.totalorder %s27, %s28
      %p39 = scmp.eq.s32.totalorder %s19, 0
      %p40 = por %p38, %p39
      %p41 = scmp.ne.s32.totalorder %s27, %s28
      %p42 = scmp.eq.s32.totalorder %s20, 1
      %p43 = por %p41, %p42
      %p45 = scmp.ne.s32.totalorder %s28, %s44
      %p46 = scmp.eq.s32.totalorder %s20, 0
      %p47 = por %p45, %p46
      %s49 = sadd.s32 %s48, 1
      %p52 = scmp.eq.s32.totalorder %s14, 1
      %p53 = scmp.ne.s32.totalorder %s48, %s50
      %p54 = scmp.eq.s32.totalorder %s14, 0
      %p55 = por %p53, %p54
      %p56 = scmp.ne.s32.totalorder %s48, %s50
      %p57 = scmp.eq.s32.totalorder %s19, 1
      %p58 = por %p56, %p57
      %p59 = scmp.ne.s32.totalorder %s50, %s51
      %p60 = scmp.eq.s32.totalorder %s19, 0
      %p61 = por %p59, %p60
      %p62 = scmp.ne.s32.totalorder %s50, %s51
      %p63 = scmp.eq.s32.totalorder %s20, 1
      %p64 = por %p62, %p63
      %p66 = scmp.ne.s32.totalorder %s51, %s65
      %p67 = scmp.eq.s32.totalorder %s20, 0
      %p68 = por %p66, %p67
      %s70 = sadd.s32 %s69, 1
      %p73 = scmp.eq.s32.totalorder %s14, 1
      %p74 = scmp.ne.s32.totalorder %s69, %s71
      %p75 = scmp.eq.s32.totalorder %s14, 0
      %p76 = por %p74, %p75
      %p77 = scmp.ne.s32.totalorder %s69, %s71
      %p78 = scmp.eq.s32.totalorder %s19, 1
      %p79 = por %p77, %p78
      %p80 = scmp.ne.s32.totalorder %s71, %s72
      %p81 = scmp.eq.s32.totalorder %s19, 0
      %p82 = por %p80, %p81
      %p83 = scmp.ne.s32.totalorder %s71, %s72
      %p84 = scmp.eq.s32.totalorder %s20, 1
      %p85 = por %p83, %p84
      %p87 = scmp.ne.s32.totalorder %s72, %s86
      %p88 = scmp.eq.s32.totalorder %s20, 0
      %p89 = por %p87, %p88
      %s91 = sadd.s32 %s90, 1
      %p94 = scmp.eq.s32.totalorder %s14, 1
      %p95 = scmp.ne.s32.totalorder %s90, %s92
      %p96 = scmp.eq.s32.totalorder %s14, 0
      %p97 = por %p95, %p96
      %p98 = scmp.ne.s32.totalorder %s90, %s92
      %p99 = scmp.eq.s32.totalorder %s19, 1
      %p100 = por %p98, %p99
      %p101 = scmp.ne.s32.totalorder %s92, %s93
      %p102 = scmp.eq.s32.totalorder %s19, 0
      %p103 = por %p101, %p102
      %p104 = scmp.ne.s32.totalorder %s92, %s93
      %p105 = scmp.eq.s32.totalorder %s20, 1
      %p106 = por %p104, %p105
      %p108 = scmp.ne.s32.totalorder %s93, %s107
      %p109 = scmp.eq.s32.totalorder %s20, 0
      %p110 = por %p108, %p109
      %s112 = sadd.s32 %s111, 1
      %p115 = scmp.eq.s32.totalorder %s14, 1
      %p116 = scmp.ne.s32.totalorder %s111, %s113
      %p117 = scmp.eq.s32.totalorder %s14, 0
      %p118 = por %p116, %p117
      %p119 = scmp.ne.s32.totalorder %s111, %s113
      %p120 = scmp.eq.s32.totalorder %s19, 1
      %p121 = por %p119, %p120
      %p122 = scmp.ne.s32.totalorder %s113, %s114
      %p123 = scmp.eq.s32.totalorder %s19, 0
      %p124 = por %p122, %p123
      %p125 = scmp.ne.s32.totalorder %s113, %s114
      %p126 = scmp.eq.s32.totalorder %s20, 1
      %p127 = por %p125, %p126
      %p129 = scmp.ne.s32.totalorder %s114, %s128
      %p130 = scmp.eq.s32.totalorder %s20, 0
      %p131 = por %p129, %p130
      %s132 = ssub.s32 %s14, %s21
      %p133 = scmp.eq.s32.totalorder %s132, 0
      %s135 = sadd.s32 %s134, 1
      %s136 = scalar_select %p133, %s134, %s135
      %p139 = pneg %p133
      %p140 = scmp.eq.s32.totalorder %s14, 1
      %p141 = por %p139, %p140
      %p142 = scmp.ne.s32.totalorder %s134, %s137
      %p143 = scmp.eq.s32.totalorder %s14, 0
      %p144 = por %p142, %p143
      %p145 = scmp.ne.s32.totalorder %s134, %s137
      %p146 = scmp.eq.s32.totalorder %s19, 1
      %p147 = por %p145, %p146
      %p148 = scmp.ne.s32.totalorder %s137, %s138
      %p149 = scmp.eq.s32.totalorder %s19, 0
      %p150 = por %p148, %p149
      %p151 = scmp.ne.s32.totalorder %s137, %s138
      %p152 = scmp.eq.s32.totalorder %s20, 1
      %p153 = por %p151, %p152
      %p155 = scmp.ne.s32.totalorder %s138, %s154
      %p156 = scmp.eq.s32.totalorder %s20, 0
      %p157 = por %p155, %p156
      %p158 = scmp.le.s32.totalorder 1, %s14
      %p159 = scmp.lt.s32.totalorder %s14, 3
      %p160 = pnand %p158, %p159
      %p161 = pneg %p160
      // Predicated region
      $region9: #{tpu_custom_call.1} parent=5 // pred_check
        _
      $region10: #{tpu_custom_call.1} parent=5 // pred_check_branch
        %163 = sbr.rel (%p160) target = $region12
      $region11: #{tpu_custom_call.1} parent=5 // pred_region
        %s164 = ssub.s32 %s14, 1
        // Predicated region
        $region13: #{tpu_custom_call.1} parent=11 // pred_check
          %p165 = pneg %p61
        $region14: #{tpu_custom_call.1} parent=11 // pred_check_branch
          %167 = sbr.rel (%p165) target = $region16
        $region15: #{tpu_custom_call.1} parent=11 // pred_region
          _
        $region16: #{tpu_custom_call.1} parent=11 // pred_fallthru
          _
        // Predicated region
        $region17: #{tpu_custom_call.1} parent=11 // pred_check
          %p168 = pneg %p82
        $region18: #{tpu_custom_call.1} parent=11 // pred_check_branch
          %170 = sbr.rel (%p168) target = $region20
        $region19: #{tpu_custom_call.1} parent=11 // pred_region
          _
        $region20: #{tpu_custom_call.1} parent=11 // pred_fallthru
          _
        // Predicated region
        $region21: #{tpu_custom_call.1} parent=11 // pred_check
          %p171 = pneg %p103
        $region22: #{tpu_custom_call.1} parent=11 // pred_check_branch
          %173 = sbr.rel (%p171) target = $region24
        $region23: #{tpu_custom_call.1} parent=11 // pred_region
          _
        $region24: #{tpu_custom_call.1} parent=11 // pred_fallthru
          _
        // Predicated region
        $region25: #{tpu_custom_call.1} parent=11 // pred_check
          %p174 = pneg %p124
        $region26: #{tpu_custom_call.1} parent=11 // pred_check_branch
          %176 = sbr.rel (%p174) target = $region28
        $region27: #{tpu_custom_call.1} parent=11 // pred_region
          _
        $region28: #{tpu_custom_call.1} parent=11 // pred_fallthru
          _
      $region12: #{tpu_custom_call.1} parent=5 // pred_fallthru
        _
      %p177 = scmp.lt.s32.totalorder %s14, 2
      // Predicated region
      $region29: #{tpu_custom_call.1} parent=5 // pred_check
        %p178 = pneg %p177
      $region30: #{tpu_custom_call.1} parent=5 // pred_check_branch
        %180 = sbr.rel (%p178) target = $region32
      $region31: #{tpu_custom_call.1} parent=5 // pred_region
        // Predicated region
        $region33: #{tpu_custom_call.1} parent=31 // pred_check
          %p181 = pneg %p34
        $region34: #{tpu_custom_call.1} parent=31 // pred_check_branch
          %183 = sbr.rel (%p181) target = $region36
        $region35: #{tpu_custom_call.1} parent=31 // pred_region
          %s184 = smul.u32 16, %s14
          %p185 = scmp.lt.s32.totalorder %s184, 31
          %s186 = scalar_select %p185, %s184, 31
          %s187 = smul.addr %s186, 8
          %s188 = scalar_lea.vmem %s0, %s187
          %s189 = smul.u32 16, %s14
        $region36: #{tpu_custom_call.1} parent=31 // pred_fallthru
          _
      $region32: #{tpu_custom_call.1} parent=5 // pred_fallthru
        _
      %p190 = scmp.le.s32.totalorder 1, %s14
      %p191 = scmp.lt.s32.totalorder %s14, 3
      %p192 = pnand %p190, %p191
      %p193 = pneg %p192
      // Predicated region
      $region37: #{tpu_custom_call.1} parent=5 // pred_check
        _
      $region38: #{tpu_custom_call.1} parent=5 // pred_check_branch
        %195 = sbr.rel (%p192) target = $region40
      $region39: #{tpu_custom_call.1} parent=5 // pred_region
        %s196 = ssub.s32 %s14, 1
        %s197 = smul.u32 16, %s19
        %p198 = scmp.lt.s32.totalorder %s197, 31
        %s199 = scalar_select %p198, %s197, 31
        %s200 = smul.addr %s199, 8
        %s201 = scalar_lea.vmem %s0, %s200
        %p202 = pneg %p40
        %p203 = pneg %p37
        %p204 = pneg %p61
        %p205 = pneg %p58
        %p206 = pneg %p82
        %p207 = pneg %p79
        %p208 = pneg %p103
        %p209 = pneg %p100
        %p210 = pneg %p124
        %p211 = pneg %p121
        %p212 = pneg %p150
        %p213 = pneg %p147
        %s214 = sand.u32 %s137, 1
        %s215 = scalar_lea.sflag [#allocation3], %s214
        %s216 = sand.u32 %s137, 1
        %s217 = smul.addr %s216, 128
        %s218 = scalar_lea.vmem [#allocation2], %s217
        %s219 = smul.u32 16, %s19
        %p220 = scmp.lt.s32.totalorder %s219, 31
        %s221 = scalar_select %p220, %s219, 31
        %s222 = smul.addr %s221, 8
        %s223 = scalar_lea.vmem %s0, %s222
        %s224 = smul.u32 16, %s19
        %s225 = smul.u32 16, %s19
        %v226 = vld [vmem:[%s223] sm:$0xff]
        %v227 = vld [vmem:[%s223 + $0x8] sm:$0xff]
        %v228 = vld [vmem:[%s223 + $0x10] sm:$0xff]
        %v229 = vld [vmem:[%s223 + $0x18] sm:$0xff]
        %v230 = vld [vmem:[%s223 + $0x20] sm:$0xff]
        %v231 = vld [vmem:[%s223 + $0x28] sm:$0xff]
        %v232 = vld [vmem:[%s223 + $0x30] sm:$0xff]
        %v233 = vld [vmem:[%s223 + $0x38] sm:$0xff]
        %v234 = vld [vmem:[%s223 + $0x40] sm:$0xff]
        %v235 = vld [vmem:[%s223 + $0x48] sm:$0xff]
        %v236 = vld [vmem:[%s223 + $0x50] sm:$0xff]
        %v237 = vld [vmem:[%s223 + $0x58] sm:$0xff]
        %v238 = vld [vmem:[%s223 + $0x60] sm:$0xff]
        %v239 = vld [vmem:[%s223 + $0x68] sm:$0xff]
        %v240 = vld [vmem:[%s223 + $0x70] sm:$0xff]
        %v241 = vld [vmem:[%s223 + $0x78] sm:$0xff]
        %v242 = vlaneseq
        %v243 = vand.u32 %v242, 127
        %244 = vset.pattern.permute.xlu0 0
        %245 = vperm.xlu0 %244, %v226
        %v246 = vpop.permute.xlu0 %245
        %247 = vset.pattern.permute.xlu0 0
        %248 = vperm.xlu0 %247, %v227
        %v249 = vpop.permute.xlu0 %248
        %250 = vset.pattern.permute.xlu0 0
        %251 = vperm.xlu0 %250, %v228
        %v252 = vpop.permute.xlu0 %251
        %253 = vset.pattern.permute.xlu0 0
        %254 = vperm.xlu0 %253, %v229
        %v255 = vpop.permute.xlu0 %254
        %256 = vset.pattern.permute.xlu0 0
        %257 = vperm.xlu0 %256, %v230
        %v258 = vpop.permute.xlu0 %257
        %259 = vset.pattern.permute.xlu0 0
        %260 = vperm.xlu0 %259, %v231
        %v261 = vpop.permute.xlu0 %260
        %262 = vset.pattern.permute.xlu0 0
        %263 = vperm.xlu0 %262, %v232
        %v264 = vpop.permute.xlu0 %263
        %265 = vset.pattern.permute.xlu0 0
        %266 = vperm.xlu0 %265, %v233
        %v267 = vpop.permute.xlu0 %266
        %268 = vset.pattern.permute.xlu0 0
        %269 = vperm.xlu0 %268, %v234
        %v270 = vpop.permute.xlu0 %269
        %271 = vset.pattern.permute.xlu0 0
        %272 = vperm.xlu0 %271, %v235
        %v273 = vpop.permute.xlu0 %272
        %274 = vset.pattern.permute.xlu0 0
        %275 = vperm.xlu0 %274, %v236
        %v276 = vpop.permute.xlu0 %275
        %277 = vset.pattern.permute.xlu0 0
        %278 = vperm.xlu0 %277, %v237
        %v279 = vpop.permute.xlu0 %278
        %280 = vset.pattern.permute.xlu0 0
        %281 = vperm.xlu0 %280, %v238
        %v282 = vpop.permute.xlu0 %281
        %283 = vset.pattern.permute.xlu0 0
        %284 = vperm.xlu0 %283, %v239
        %v285 = vpop.permute.xlu0 %284
        %286 = vset.pattern.permute.xlu0 0
        %287 = vperm.xlu0 %286, %v240
        %v288 = vpop.permute.xlu0 %287
        %289 = vset.pattern.permute.xlu0 0
        %290 = vperm.xlu0 %289, %v241
        %v291 = vpop.permute.xlu0 %290
        %vm292 = vcmp.eq.s32.totalorder %v246, %v243
        %vm293 = vcmp.eq.s32.totalorder %v249, %v243
        %vm294 = vcmp.eq.s32.totalorder %v252, %v243
        %vm295 = vcmp.eq.s32.totalorder %v255, %v243
        %vm296 = vcmp.eq.s32.totalorder %v258, %v243
        %vm297 = vcmp.eq.s32.totalorder %v261, %v243
        %vm298 = vcmp.eq.s32.totalorder %v264, %v243
        %vm299 = vcmp.eq.s32.totalorder %v267, %v243
        %vm300 = vcmp.eq.s32.totalorder %v270, %v243
        %vm301 = vcmp.eq.s32.totalorder %v273, %v243
        %vm302 = vcmp.eq.s32.totalorder %v276, %v243
        %vm303 = vcmp.eq.s32.totalorder %v279, %v243
        %vm304 = vcmp.eq.s32.totalorder %v282, %v243
        %vm305 = vcmp.eq.s32.totalorder %v285, %v243
        %vm306 = vcmp.eq.s32.totalorder %v288, %v243
        %vm307 = vcmp.eq.s32.totalorder %v291, %v243
        %v308 = vsel %vm292, 1, 0
        %v309 = vsel %vm293, 1, 0
        %v310 = vsel %vm294, 1, 0
        %v311 = vsel %vm295, 1, 0
        %v312 = vsel %vm296, 1, 0
        %v313 = vsel %vm297, 1, 0
        %v314 = vsel %vm298, 1, 0
        %v315 = vsel %vm299, 1, 0
        %v316 = vsel %vm300, 1, 0
        %v317 = vsel %vm301, 1, 0
        %v318 = vsel %vm302, 1, 0
        %v319 = vsel %vm303, 1, 0
        %v320 = vsel %vm304, 1, 0
        %v321 = vsel %vm305, 1, 0
        %v322 = vsel %vm306, 1, 0
        %v323 = vsel %vm307, 1, 0
        %v324 = vcvt.s32.f32 %v308
        %v325 = vcvt.s32.f32 %v309
        %v326 = vcvt.s32.f32 %v310
        %v327 = vcvt.s32.f32 %v311
        %v328 = vcvt.s32.f32 %v312
        %v329 = vcvt.s32.f32 %v313
        %v330 = vcvt.s32.f32 %v314
        %v331 = vcvt.s32.f32 %v315
        %v332 = vcvt.s32.f32 %v316
        %v333 = vcvt.s32.f32 %v317
        %v334 = vcvt.s32.f32 %v318
        %v335 = vcvt.s32.f32 %v319
        %v336 = vcvt.s32.f32 %v320
        %v337 = vcvt.s32.f32 %v321
        %v338 = vcvt.s32.f32 %v322
        %v339 = vcvt.s32.f32 %v323
        %v340 = vadd.f32 %v324, 0.0
        %v341 = vadd.f32 %v325, 0.0
        %v342 = vadd.f32 %v326, 0.0
        %v343 = vadd.f32 %v327, 0.0
        %v344 = vadd.f32 %v328, 0.0
        %v345 = vadd.f32 %v329, 0.0
        %v346 = vadd.f32 %v330, 0.0
        %v347 = vadd.f32 %v331, 0.0
        %v348 = vadd.f32 %v332, 0.0
        %v349 = vadd.f32 %v333, 0.0
        %v350 = vadd.f32 %v334, 0.0
        %v351 = vadd.f32 %v335, 0.0
        %v352 = vadd.f32 %v336, 0.0
        %v353 = vadd.f32 %v337, 0.0
        %v354 = vadd.f32 %v338, 0.0
        %v355 = vadd.f32 %v339, 0.0
        %356 = vset.pattern.permute.xlu0 1
        %357 = vperm.xlu0 %356, %v226
        %v358 = vpop.permute.xlu0 %357
        %359 = vset.pattern.permute.xlu0 1
        %360 = vperm.xlu0 %359, %v227
        %v361 = vpop.permute.xlu0 %360
        %362 = vset.pattern.permute.xlu0 1
        %363 = vperm.xlu0 %362, %v228
        %v364 = vpop.permute.xlu0 %363
        %365 = vset.pattern.permute.xlu0 1
        %366 = vperm.xlu0 %365, %v229
        %v367 = vpop.permute.xlu0 %366
        %368 = vset.pattern.permute.xlu0 1
        %369 = vperm.xlu0 %368, %v230
        %v370 = vpop.permute.xlu0 %369
        %371 = vset.pattern.permute.xlu0 1
        %372 = vperm.xlu0 %371, %v231
        %v373 = vpop.permute.xlu0 %372
        %374 = vset.pattern.permute.xlu0 1
        %375 = vperm.xlu0 %374, %v232
        %v376 = vpop.permute.xlu0 %375
        %377 = vset.pattern.permute.xlu0 1
        %378 = vperm.xlu0 %377, %v233
        %v379 = vpop.permute.xlu0 %378
        %380 = vset.pattern.permute.xlu0 1
        %381 = vperm.xlu0 %380, %v234
        %v382 = vpop.permute.xlu0 %381
        %383 = vset.pattern.permute.xlu0 1
        %384 = vperm.xlu0 %383, %v235
        %v385 = vpop.permute.xlu0 %384
        %386 = vset.pattern.permute.xlu0 1
        %387 = vperm.xlu0 %386, %v236
        %v388 = vpop.permute.xlu0 %387
        %389 = vset.pattern.permute.xlu0 1
        %390 = vperm.xlu0 %389, %v237
        %v391 = vpop.permute.xlu0 %390
        %392 = vset.pattern.permute.xlu0 1
        %393 = vperm.xlu0 %392, %v238
        %v394 = vpop.permute.xlu0 %393
        %395 = vset.pattern.permute.xlu0 1
        %396 = vperm.xlu0 %395, %v239
        %v397 = vpop.permute.xlu0 %396
        %398 = vset.pattern.permute.xlu0 1
        %399 = vperm.xlu0 %398, %v240
        %v400 = vpop.permute.xlu0 %399
        %401 = vset.pattern.permute.xlu0 1
        %402 = vperm.xlu0 %401, %v241
        %v403 = vpop.permute.xlu0 %402
        %vm404 = vcmp.eq.s32.totalorder %v358, %v243
        %vm405 = vcmp.eq.s32.totalorder %v361, %v243
        %vm406 = vcmp.eq.s32.totalorder %v364, %v243
        %vm407 = vcmp.eq.s32.totalorder %v367, %v243
        %vm408 = vcmp.eq.s32.totalorder %v370, %v243
        %vm409 = vcmp.eq.s32.totalorder %v373, %v243
        %vm410 = vcmp.eq.s32.totalorder %v376, %v243
        %vm411 = vcmp.eq.s32.totalorder %v379, %v243
        %vm412 = vcmp.eq.s32.totalorder %v382, %v243
        %vm413 = vcmp.eq.s32.totalorder %v385, %v243
        %vm414 = vcmp.eq.s32.totalorder %v388, %v243
        %vm415 = vcmp.eq.s32.totalorder %v391, %v243
        %vm416 = vcmp.eq.s32.totalorder %v394, %v243
        %vm417 = vcmp.eq.s32.totalorder %v397, %v243
        %vm418 = vcmp.eq.s32.totalorder %v400, %v243
        %vm419 = vcmp.eq.s32.totalorder %v403, %v243
        %v420 = vsel %vm404, 1, 0
        %v421 = vsel %vm405, 1, 0
        %v422 = vsel %vm406, 1, 0
        %v423 = vsel %vm407, 1, 0
        %v424 = vsel %vm408, 1, 0
        %v425 = vsel %vm409, 1, 0
        %v426 = vsel %vm410, 1, 0
        %v427 = vsel %vm411, 1, 0
        %v428 = vsel %vm412, 1, 0
        %v429 = vsel %vm413, 1, 0
        %v430 = vsel %vm414, 1, 0
        %v431 = vsel %vm415, 1, 0
        %v432 = vsel %vm416, 1, 0
        %v433 = vsel %vm417, 1, 0
        %v434 = vsel %vm418, 1, 0
        %v435 = vsel %vm419, 1, 0
        %v436 = vcvt.s32.f32 %v420
        %v437 = vcvt.s32.f32 %v421
        %v438 = vcvt.s32.f32 %v422
        %v439 = vcvt.s32.f32 %v423
        %v440 = vcvt.s32.f32 %v424
        %v441 = vcvt.s32.f32 %v425
        %v442 = vcvt.s32.f32 %v426
        %v443 = vcvt.s32.f32 %v427
        %v444 = vcvt.s32.f32 %v428
        %v445 = vcvt.s32.f32 %v429
        %v446 = vcvt.s32.f32 %v430
        %v447 = vcvt.s32.f32 %v431
        %v448 = vcvt.s32.f32 %v432
        %v449 = vcvt.s32.f32 %v433
        %v450 = vcvt.s32.f32 %v434
        %v451 = vcvt.s32.f32 %v435
        %v452 = vadd.f32 %v340, %v436
        %v453 = vadd.f32 %v341, %v437
        %v454 = vadd.f32 %v342, %v438
        %v455 = vadd.f32 %v343, %v439
        %v456 = vadd.f32 %v344, %v440
        %v457 = vadd.f32 %v345, %v441
        %v458 = vadd.f32 %v346, %v442
        %v459 = vadd.f32 %v347, %v443
        %v460 = vadd.f32 %v348, %v444
        %v461 = vadd.f32 %v349, %v445
        %v462 = vadd.f32 %v350, %v446
        %v463 = vadd.f32 %v351, %v447
        %v464 = vadd.f32 %v352, %v448
        %v465 = vadd.f32 %v353, %v449
        %v466 = vadd.f32 %v354, %v450
        %v467 = vadd.f32 %v355, %v451
        %468 = vset.pattern.permute.xlu0 2
        %469 = vperm.xlu0 %468, %v226
        %v470 = vpop.permute.xlu0 %469
        %471 = vset.pattern.permute.xlu0 2
        %472 = vperm.xlu0 %471, %v227
        %v473 = vpop.permute.xlu0 %472
        %474 = vset.pattern.permute.xlu0 2
        %475 = vperm.xlu0 %474, %v228
        %v476 = vpop.permute.xlu0 %475
        %477 = vset.pattern.permute.xlu0 2
        %478 = vperm.xlu0 %477, %v229
        %v479 = vpop.permute.xlu0 %478
        %480 = vset.pattern.permute.xlu0 2
        %481 = vperm.xlu0 %480, %v230
        %v482 = vpop.permute.xlu0 %481
        %483 = vset.pattern.permute.xlu0 2
        %484 = vperm.xlu0 %483, %v231
        %v485 = vpop.permute.xlu0 %484
        %486 = vset.pattern.permute.xlu0 2
        %487 = vperm.xlu0 %486, %v232
        %v488 = vpop.permute.xlu0 %487
        %489 = vset.pattern.permute.xlu0 2
        %490 = vperm.xlu0 %489, %v233
        %v491 = vpop.permute.xlu0 %490
        %492 = vset.pattern.permute.xlu0 2
        %493 = vperm.xlu0 %492, %v234
        %v494 = vpop.permute.xlu0 %493
        %495 = vset.pattern.permute.xlu0 2
        %496 = vperm.xlu0 %495, %v235
        %v497 = vpop.permute.xlu0 %496
        %498 = vset.pattern.permute.xlu0 2
        %499 = vperm.xlu0 %498, %v236
        %v500 = vpop.permute.xlu0 %499
        %501 = vset.pattern.permute.xlu0 2
        %502 = vperm.xlu0 %501, %v237
        %v503 = vpop.permute.xlu0 %502
        %504 = vset.pattern.permute.xlu0 2
        %505 = vperm.xlu0 %504, %v238
        %v506 = vpop.permute.xlu0 %505
        %507 = vset.pattern.permute.xlu0 2
        %508 = vperm.xlu0 %507, %v239
        %v509 = vpop.permute.xlu0 %508
        %510 = vset.pattern.permute.xlu0 2
        %511 = vperm.xlu0 %510, %v240
        %v512 = vpop.permute.xlu0 %511
        %513 = vset.pattern.permute.xlu0 2
        %514 = vperm.xlu0 %513, %v241
        %v515 = vpop.permute.xlu0 %514
        %vm516 = vcmp.eq.s32.totalorder %v470, %v243
        %vm517 = vcmp.eq.s32.totalorder %v473, %v243
        %vm518 = vcmp.eq.s32.totalorder %v476, %v243
        %vm519 = vcmp.eq.s32.totalorder %v479, %v243
        %vm520 = vcmp.eq.s32.totalorder %v482, %v243
        %vm521 = vcmp.eq.s32.totalorder %v485, %v243
        %vm522 = vcmp.eq.s32.totalorder %v488, %v243
        %vm523 = vcmp.eq.s32.totalorder %v491, %v243
        %vm524 = vcmp.eq.s32.totalorder %v494, %v243
        %vm525 = vcmp.eq.s32.totalorder %v497, %v243
        %vm526 = vcmp.eq.s32.totalorder %v500, %v243
        %vm527 = vcmp.eq.s32.totalorder %v503, %v243
        %vm528 = vcmp.eq.s32.totalorder %v506, %v243
        %vm529 = vcmp.eq.s32.totalorder %v509, %v243
        %vm530 = vcmp.eq.s32.totalorder %v512, %v243
        %vm531 = vcmp.eq.s32.totalorder %v515, %v243
        %v532 = vsel %vm516, 1, 0
        %v533 = vsel %vm517, 1, 0
        %v534 = vsel %vm518, 1, 0
        %v535 = vsel %vm519, 1, 0
        %v536 = vsel %vm520, 1, 0
        %v537 = vsel %vm521, 1, 0
        %v538 = vsel %vm522, 1, 0
        %v539 = vsel %vm523, 1, 0
        %v540 = vsel %vm524, 1, 0
        %v541 = vsel %vm525, 1, 0
        %v542 = vsel %vm526, 1, 0
        %v543 = vsel %vm527, 1, 0
        %v544 = vsel %vm528, 1, 0
        %v545 = vsel %vm529, 1, 0
        %v546 = vsel %vm530, 1, 0
        %v547 = vsel %vm531, 1, 0
        %v548 = vcvt.s32.f32 %v532
        %v549 = vcvt.s32.f32 %v533
        %v550 = vcvt.s32.f32 %v534
        %v551 = vcvt.s32.f32 %v535
        %v552 = vcvt.s32.f32 %v536
        %v553 = vcvt.s32.f32 %v537
        %v554 = vcvt.s32.f32 %v538
        %v555 = vcvt.s32.f32 %v539
        %v556 = vcvt.s32.f32 %v540
        %v557 = vcvt.s32.f32 %v541
        %v558 = vcvt.s32.f32 %v542
        %v559 = vcvt.s32.f32 %v543
        %v560 = vcvt.s32.f32 %v544
        %v561 = vcvt.s32.f32 %v545
        %v562 = vcvt.s32.f32 %v546
        %v563 = vcvt.s32.f32 %v547
        %v564 = vadd.f32 %v452, %v548
        %v565 = vadd.f32 %v453, %v549
        %v566 = vadd.f32 %v454, %v550
        %v567 = vadd.f32 %v455, %v551
        %v568 = vadd.f32 %v456, %v552
        %v569 = vadd.f32 %v457, %v553
        %v570 = vadd.f32 %v458, %v554
        %v571 = vadd.f32 %v459, %v555
        %v572 = vadd.f32 %v460, %v556
        %v573 = vadd.f32 %v461, %v557
        %v574 = vadd.f32 %v462, %v558
        %v575 = vadd.f32 %v463, %v559
        %v576 = vadd.f32 %v464, %v560
        %v577 = vadd.f32 %v465, %v561
        %v578 = vadd.f32 %v466, %v562
        %v579 = vadd.f32 %v467, %v563
        %580 = vset.pattern.permute.xlu0 3
        %581 = vperm.xlu0 %580, %v226
        %v582 = vpop.permute.xlu0 %581
        %583 = vset.pattern.permute.xlu0 3
        %584 = vperm.xlu0 %583, %v227
        %v585 = vpop.permute.xlu0 %584
        %586 = vset.pattern.permute.xlu0 3
        %587 = vperm.xlu0 %586, %v228
        %v588 = vpop.permute.xlu0 %587
        %589 = vset.pattern.permute.xlu0 3
        %590 = vperm.xlu0 %589, %v229
        %v591 = vpop.permute.xlu0 %590
        %592 = vset.pattern.permute.xlu0 3
        %593 = vperm.xlu0 %592, %v230
        %v594 = vpop.permute.xlu0 %593
        %595 = vset.pattern.permute.xlu0 3
        %596 = vperm.xlu0 %595, %v231
        %v597 = vpop.permute.xlu0 %596
        %598 = vset.pattern.permute.xlu0 3
        %599 = vperm.xlu0 %598, %v232
        %v600 = vpop.permute.xlu0 %599
        %601 = vset.pattern.permute.xlu0 3
        %602 = vperm.xlu0 %601, %v233
        %v603 = vpop.permute.xlu0 %602
        %604 = vset.pattern.permute.xlu0 3
        %605 = vperm.xlu0 %604, %v234
        %v606 = vpop.permute.xlu0 %605
        %607 = vset.pattern.permute.xlu0 3
        %608 = vperm.xlu0 %607, %v235
        %v609 = vpop.permute.xlu0 %608
        %610 = vset.pattern.permute.xlu0 3
        %611 = vperm.xlu0 %610, %v236
        %v612 = vpop.permute.xlu0 %611
        %613 = vset.pattern.permute.xlu0 3
        %614 = vperm.xlu0 %613, %v237
        %v615 = vpop.permute.xlu0 %614
        %616 = vset.pattern.permute.xlu0 3
        %617 = vperm.xlu0 %616, %v238
        %v618 = vpop.permute.xlu0 %617
        %619 = vset.pattern.permute.xlu0 3
        %620 = vperm.xlu0 %619, %v239
        %v621 = vpop.permute.xlu0 %620
        %622 = vset.pattern.permute.xlu0 3
        %623 = vperm.xlu0 %622, %v240
        %v624 = vpop.permute.xlu0 %623
        %625 = vset.pattern.permute.xlu0 3
        %626 = vperm.xlu0 %625, %v241
        %v627 = vpop.permute.xlu0 %626
        %vm628 = vcmp.eq.s32.totalorder %v582, %v243
        %vm629 = vcmp.eq.s32.totalorder %v585, %v243
        %vm630 = vcmp.eq.s32.totalorder %v588, %v243
        %vm631 = vcmp.eq.s32.totalorder %v591, %v243
        %vm632 = vcmp.eq.s32.totalorder %v594, %v243
        %vm633 = vcmp.eq.s32.totalorder %v597, %v243
        %vm634 = vcmp.eq.s32.totalorder %v600, %v243
        %vm635 = vcmp.eq.s32.totalorder %v603, %v243
        %vm636 = vcmp.eq.s32.totalorder %v606, %v243
        %vm637 = vcmp.eq.s32.totalorder %v609, %v243
        %vm638 = vcmp.eq.s32.totalorder %v612, %v243
        %vm639 = vcmp.eq.s32.totalorder %v615, %v243
        %vm640 = vcmp.eq.s32.totalorder %v618, %v243
        %vm641 = vcmp.eq.s32.totalorder %v621, %v243
        %vm642 = vcmp.eq.s32.totalorder %v624, %v243
        %vm643 = vcmp.eq.s32.totalorder %v627, %v243
        %v644 = vsel %vm628, 1, 0
        %v645 = vsel %vm629, 1, 0
        %v646 = vsel %vm630, 1, 0
        %v647 = vsel %vm631, 1, 0
        %v648 = vsel %vm632, 1, 0
        %v649 = vsel %vm633, 1, 0
        %v650 = vsel %vm634, 1, 0
        %v651 = vsel %vm635, 1, 0
        %v652 = vsel %vm636, 1, 0
        %v653 = vsel %vm637, 1, 0
        %v654 = vsel %vm638, 1, 0
        %v655 = vsel %vm639, 1, 0
        %v656 = vsel %vm640, 1, 0
        %v657 = vsel %vm641, 1, 0
        %v658 = vsel %vm642, 1, 0
        %v659 = vsel %vm643, 1, 0
        %v660 = vcvt.s32.f32 %v644
        %v661 = vcvt.s32.f32 %v645
        %v662 = vcvt.s32.f32 %v646
        %v663 = vcvt.s32.f32 %v647
        %v664 = vcvt.s32.f32 %v648
        %v665 = vcvt.s32.f32 %v649
        %v666 = vcvt.s32.f32 %v650
        %v667 = vcvt.s32.f32 %v651
        %v668 = vcvt.s32.f32 %v652
        %v669 = vcvt.s32.f32 %v653
        %v670 = vcvt.s32.f32 %v654
        %v671 = vcvt.s32.f32 %v655
        %v672 = vcvt.s32.f32 %v656
        %v673 = vcvt.s32.f32 %v657
        %v674 = vcvt.s32.f32 %v658
        %v675 = vcvt.s32.f32 %v659
        %v676 = vadd.f32 %v564, %v660
        %v677 = vadd.f32 %v565, %v661
        %v678 = vadd.f32 %v566, %v662
        %v679 = vadd.f32 %v567, %v663
        %v680 = vadd.f32 %v568, %v664
        %v681 = vadd.f32 %v569, %v665
        %v682 = vadd.f32 %v570, %v666
        %v683 = vadd.f32 %v571, %v667
        %v684 = vadd.f32 %v572, %v668
        %v685 = vadd.f32 %v573, %v669
        %v686 = vadd.f32 %v574, %v670
        %v687 = vadd.f32 %v575, %v671
        %v688 = vadd.f32 %v576, %v672
        %v689 = vadd.f32 %v577, %v673
        %v690 = vadd.f32 %v578, %v674
        %v691 = vadd.f32 %v579, %v675
        %v692 = vld [vmem:[%s1] sm:$0xff]
        %v693 = vld [vmem:[%s1 + $0x8] sm:$0xff]
        %v694 = vld [vmem:[%s1 + $0x10] sm:$0xff]
        %v695 = vld [vmem:[%s1 + $0x18] sm:$0xff]
        %v696 = vld [vmem:[%s1 + $0x20] sm:$0xff]
        %v697 = vld [vmem:[%s1 + $0x28] sm:$0xff]
        %v698 = vld [vmem:[%s1 + $0x30] sm:$0xff]
        %v699 = vld [vmem:[%s1 + $0x38] sm:$0xff]
        %v700 = vld [vmem:[%s1 + $0x40] sm:$0xff]
        %v701 = vld [vmem:[%s1 + $0x48] sm:$0xff]
        %v702 = vld [vmem:[%s1 + $0x50] sm:$0xff]
        %v703 = vld [vmem:[%s1 + $0x58] sm:$0xff]
        %v704 = vld [vmem:[%s1 + $0x60] sm:$0xff]
        %v705 = vld [vmem:[%s1 + $0x68] sm:$0xff]
        %v706 = vld [vmem:[%s1 + $0x70] sm:$0xff]
        %v707 = vld [vmem:[%s1 + $0x78] sm:$0xff]
        %v708 = vld [vmem:[%s2] sm:$0x1]
        %v710 = vlaneseq
        %v711 = vshrl.u32 %v710, 7
        %v712 = vsub.s32 0, %v711
        %v713 = vrot.slane %v708, %v712
        %715 = vmatprep.subr.mxu0 0.0
        %716 = vmatpush1.msra.mxu0 %v707
        %717 = vmatprep.subr.mxu0 0.0
        %718 = vmatpush1.msra.mxu0 %v706
        %719 = vmatprep.subr.mxu0 0.0
        %720 = vmatpush1.msra.mxu0 %v705
        %721 = vmatprep.subr.mxu0 0.0
        %722 = vmatpush1.msra.mxu0 %v704
        %723 = vmatprep.subr.mxu0 0.0
        %724 = vmatpush1.msra.mxu0 %v703
        %725 = vmatprep.subr.mxu0 0.0
        %726 = vmatpush1.msra.mxu0 %v702
        %727 = vmatprep.subr.mxu0 0.0
        %728 = vmatpush1.msra.mxu0 %v701
        %729 = vmatprep.subr.mxu0 0.0
        %730 = vmatpush1.msra.mxu0 %v700
        %731 = vmatprep.subr.mxu0 0.0
        %732 = vmatpush1.msra.mxu0 %v699
        %733 = vmatprep.subr.mxu0 0.0
        %734 = vmatpush1.msra.mxu0 %v698
        %735 = vmatprep.subr.mxu0 0.0
        %736 = vmatpush1.msra.mxu0 %v697
        %737 = vmatprep.subr.mxu0 0.0
        %738 = vmatpush1.msra.mxu0 %v696
        %739 = vmatprep.subr.mxu0 0.0
        %740 = vmatpush1.msra.mxu0 %v695
        %741 = vmatprep.subr.mxu0 0.0
        %742 = vmatpush1.msra.mxu0 %v694
        %743 = vmatprep.subr.mxu0 0.0
        %744 = vmatpush1.msra.mxu0 %v693
        %745 = vmatprep.subr.mxu0 0.0
        %746 = vmatpush1.msra.mxu0 %v692
        %747 = vmatprep.subr.mxu0 0.0
        %748 = vmatpush2.msra.mxu0 0.0
        %749 = vmatprep.subr.mxu0 0.0
        %750 = vmatpush2.msra.mxu0 0.0
        %751 = vmatprep.subr.mxu0 0.0
        %752 = vmatpush2.msra.mxu0 0.0
        %753 = vmatprep.subr.mxu0 0.0
        %754 = vmatpush2.msra.mxu0 0.0
        %755 = vmatprep.subr.mxu0 0.0
        %756 = vmatpush2.msra.mxu0 0.0
        %757 = vmatprep.subr.mxu0 0.0
        %758 = vmatpush2.msra.mxu0 0.0
        %759 = vmatprep.subr.mxu0 0.0
        %760 = vmatpush2.msra.mxu0 0.0
        %761 = vmatprep.subr.mxu0 0.0
        %762 = vmatpush2.msra.mxu0 0.0
        %763 = vmatprep.subr.mxu0 0.0
        %764 = vmatpush2.msra.mxu0 0.0
        %765 = vmatprep.subr.mxu0 0.0
        %766 = vmatpush2.msra.mxu0 0.0
        %767 = vmatprep.subr.mxu0 0.0
        %768 = vmatpush2.msra.mxu0 0.0
        %769 = vmatprep.subr.mxu0 0.0
        %770 = vmatpush2.msra.mxu0 0.0
        %771 = vmatprep.subr.mxu0 0.0
        %772 = vmatpush2.msra.mxu0 0.0
        %773 = vmatprep.subr.mxu0 0.0
        %774 = vmatpush2.msra.mxu0 0.0
        %775 = vmatprep.subr.mxu0 0.0
        %776 = vmatpush2.msra.mxu0 0.0
        %777 = vmatprep.subr.mxu0 0.0
        %778 = vmatpush2.msra.mxu0 0.0
        %779 = vmatprep.mubr.f32.mxu0 0.0
        %780 = vmatmul.mubr.f32.gmra.mxu0 %v676
        %v781 = vpop.f32.mrf.mxu0
        %v782 = vadd.f32 %v713, %v781
        %v783 = vpop.f32.mrf.mxu0
        %784 = vmatprep.mubr.f32.mxu0 0.0
        %785 = vmatmul.mubr.f32.gmra.mxu0 %v677
        %v786 = vpop.f32.mrf.mxu0
        %v787 = vadd.f32 %v713, %v786
        %v788 = vpop.f32.mrf.mxu0
        %789 = vmatprep.mubr.f32.mxu0 0.0
        %790 = vmatmul.mubr.f32.gmra.mxu0 %v678
        %v791 = vpop.f32.mrf.mxu0
        %v792 = vadd.f32 %v713, %v791
        %v793 = vpop.f32.mrf.mxu0
        %794 = vmatprep.mubr.f32.mxu0 0.0
        %795 = vmatmul.mubr.f32.gmra.mxu0 %v679
        %v796 = vpop.f32.mrf.mxu0
        %v797 = vadd.f32 %v713, %v796
        %v798 = vpop.f32.mrf.mxu0
        %799 = vmatprep.mubr.f32.mxu0 0.0
        %800 = vmatmul.mubr.f32.gmra.mxu0 %v680
        %v801 = vpop.f32.mrf.mxu0
        %v802 = vadd.f32 %v713, %v801
        %v803 = vpop.f32.mrf.mxu0
        %804 = vmatprep.mubr.f32.mxu0 0.0
        %805 = vmatmul.mubr.f32.gmra.mxu0 %v681
        %v806 = vpop.f32.mrf.mxu0
        %v807 = vadd.f32 %v713, %v806
        %v808 = vpop.f32.mrf.mxu0
        %809 = vmatprep.mubr.f32.mxu0 0.0
        %810 = vmatmul.mubr.f32.gmra.mxu0 %v682
        %v811 = vpop.f32.mrf.mxu0
        %v812 = vadd.f32 %v713, %v811
        %v813 = vpop.f32.mrf.mxu0
        %814 = vmatprep.mubr.f32.mxu0 0.0
        %815 = vmatmul.mubr.f32.gmra.mxu0 %v683
        %v816 = vpop.f32.mrf.mxu0
        %v817 = vadd.f32 %v713, %v816
        %v818 = vpop.f32.mrf.mxu0
        %819 = vmatprep.mubr.f32.mxu0 0.0
        %820 = vmatmul.mubr.f32.gmra.mxu0 %v684
        %v821 = vpop.f32.mrf.mxu0
        %v822 = vadd.f32 %v713, %v821
        %v823 = vpop.f32.mrf.mxu0
        %824 = vmatprep.mubr.f32.mxu0 0.0
        %825 = vmatmul.mubr.f32.gmra.mxu0 %v685
        %v826 = vpop.f32.mrf.mxu0
        %v827 = vadd.f32 %v713, %v826
        %v828 = vpop.f32.mrf.mxu0
        %829 = vmatprep.mubr.f32.mxu0 0.0
        %830 = vmatmul.mubr.f32.gmra.mxu0 %v686
        %v831 = vpop.f32.mrf.mxu0
        %v832 = vadd.f32 %v713, %v831
        %v833 = vpop.f32.mrf.mxu0
        %834 = vmatprep.mubr.f32.mxu0 0.0
        %835 = vmatmul.mubr.f32.gmra.mxu0 %v687
        %v836 = vpop.f32.mrf.mxu0
        %v837 = vadd.f32 %v713, %v836
        %v838 = vpop.f32.mrf.mxu0
        %839 = vmatprep.mubr.f32.mxu0 0.0
        %840 = vmatmul.mubr.f32.gmra.mxu0 %v688
        %v841 = vpop.f32.mrf.mxu0
        %v842 = vadd.f32 %v713, %v841
        %v843 = vpop.f32.mrf.mxu0
        %844 = vmatprep.mubr.f32.mxu0 0.0
        %845 = vmatmul.mubr.f32.gmra.mxu0 %v689
        %v846 = vpop.f32.mrf.mxu0
        %v847 = vadd.f32 %v713, %v846
        %v848 = vpop.f32.mrf.mxu0
        %849 = vmatprep.mubr.f32.mxu0 0.0
        %850 = vmatmul.mubr.f32.gmra.mxu0 %v690
        %v851 = vpop.f32.mrf.mxu0
        %v852 = vadd.f32 %v713, %v851
        %v853 = vpop.f32.mrf.mxu0
        %854 = vmatprep.mubr.f32.mxu0 0.0
        %855 = vmatmul.mubr.f32.gmra.mxu0 %v691
        %v856 = vpop.f32.mrf.mxu0
        %v857 = vadd.f32 %v713, %v856
        %v858 = vpop.f32.mrf.mxu0
        %859 = vdwg.mxu0
        %v860 = vmax.f32 %v782, 0.0
        %v861 = vmax.f32 %v787, 0.0
        %v862 = vmax.f32 %v792, 0.0
        %v863 = vmax.f32 %v797, 0.0
        %v864 = vmax.f32 %v802, 0.0
        %v865 = vmax.f32 %v807, 0.0
        %v866 = vmax.f32 %v812, 0.0
        %v867 = vmax.f32 %v817, 0.0
        %v868 = vmax.f32 %v822, 0.0
        %v869 = vmax.f32 %v827, 0.0
        %v870 = vmax.f32 %v832, 0.0
        %v871 = vmax.f32 %v837, 0.0
        %v872 = vmax.f32 %v842, 0.0
        %v873 = vmax.f32 %v847, 0.0
        %v874 = vmax.f32 %v852, 0.0
        %v875 = vmax.f32 %v857, 0.0
        %v876 = vld [vmem:[%s3] sm:$0xff]
        %v877 = vld [vmem:[%s3 + $0x8] sm:$0xff]
        %v878 = vld [vmem:[%s3 + $0x10] sm:$0xff]
        %v879 = vld [vmem:[%s3 + $0x18] sm:$0xff]
        %v880 = vld [vmem:[%s3 + $0x20] sm:$0xff]
        %v881 = vld [vmem:[%s3 + $0x28] sm:$0xff]
        %v882 = vld [vmem:[%s3 + $0x30] sm:$0xff]
        %v883 = vld [vmem:[%s3 + $0x38] sm:$0xff]
        %v884 = vld [vmem:[%s3 + $0x40] sm:$0xff]
        %v885 = vld [vmem:[%s3 + $0x48] sm:$0xff]
        %v886 = vld [vmem:[%s3 + $0x50] sm:$0xff]
        %v887 = vld [vmem:[%s3 + $0x58] sm:$0xff]
        %v888 = vld [vmem:[%s3 + $0x60] sm:$0xff]
        %v889 = vld [vmem:[%s3 + $0x68] sm:$0xff]
        %v890 = vld [vmem:[%s3 + $0x70] sm:$0xff]
        %v891 = vld [vmem:[%s3 + $0x78] sm:$0xff]
        %v892 = vld [vmem:[%s4] sm:$0x1]
        %v894 = vlaneseq
        %v895 = vshrl.u32 %v894, 7
        %v896 = vsub.s32 0, %v895
        %v897 = vrot.slane %v892, %v896
        %899 = vmatprep.subr.mxu0 0.0
        %900 = vmatpush1.msra.mxu0 %v891
        %901 = vmatprep.subr.mxu0 0.0
        %902 = vmatpush1.msra.mxu0 %v890
        %903 = vmatprep.subr.mxu0 0.0
        %904 = vmatpush1.msra.mxu0 %v889
        %905 = vmatprep.subr.mxu0 0.0
        %906 = vmatpush1.msra.mxu0 %v888
        %907 = vmatprep.subr.mxu0 0.0
        %908 = vmatpush1.msra.mxu0 %v887
        %909 = vmatprep.subr.mxu0 0.0
        %910 = vmatpush1.msra.mxu0 %v886
        %911 = vmatprep.subr.mxu0 0.0
        %912 = vmatpush1.msra.mxu0 %v885
        %913 = vmatprep.subr.mxu0 0.0
        %914 = vmatpush1.msra.mxu0 %v884
        %915 = vmatprep.subr.mxu0 0.0
        %916 = vmatpush1.msra.mxu0 %v883
        %917 = vmatprep.subr.mxu0 0.0
        %918 = vmatpush1.msra.mxu0 %v882
        %919 = vmatprep.subr.mxu0 0.0
        %920 = vmatpush1.msra.mxu0 %v881
        %921 = vmatprep.subr.mxu0 0.0
        %922 = vmatpush1.msra.mxu0 %v880
        %923 = vmatprep.subr.mxu0 0.0
        %924 = vmatpush1.msra.mxu0 %v879
        %925 = vmatprep.subr.mxu0 0.0
        %926 = vmatpush1.msra.mxu0 %v878
        %927 = vmatprep.subr.mxu0 0.0
        %928 = vmatpush1.msra.mxu0 %v877
        %929 = vmatprep.subr.mxu0 0.0
        %930 = vmatpush1.msra.mxu0 %v876
        %931 = vmatprep.subr.mxu0 0.0
        %932 = vmatpush2.msra.mxu0 0.0
        %933 = vmatprep.subr.mxu0 0.0
        %934 = vmatpush2.msra.mxu0 0.0
        %935 = vmatprep.subr.mxu0 0.0
        %936 = vmatpush2.msra.mxu0 0.0
        %937 = vmatprep.subr.mxu0 0.0
        %938 = vmatpush2.msra.mxu0 0.0
        %939 = vmatprep.subr.mxu0 0.0
        %940 = vmatpush2.msra.mxu0 0.0
        %941 = vmatprep.subr.mxu0 0.0
        %942 = vmatpush2.msra.mxu0 0.0
        %943 = vmatprep.subr.mxu0 0.0
        %944 = vmatpush2.msra.mxu0 0.0
        %945 = vmatprep.subr.mxu0 0.0
        %946 = vmatpush2.msra.mxu0 0.0
        %947 = vmatprep.subr.mxu0 0.0
        %948 = vmatpush2.msra.mxu0 0.0
        %949 = vmatprep.subr.mxu0 0.0
        %950 = vmatpush2.msra.mxu0 0.0
        %951 = vmatprep.subr.mxu0 0.0
        %952 = vmatpush2.msra.mxu0 0.0
        %953 = vmatprep.subr.mxu0 0.0
        %954 = vmatpush2.msra.mxu0 0.0
        %955 = vmatprep.subr.mxu0 0.0
        %956 = vmatpush2.msra.mxu0 0.0
        %957 = vmatprep.subr.mxu0 0.0
        %958 = vmatpush2.msra.mxu0 0.0
        %959 = vmatprep.subr.mxu0 0.0
        %960 = vmatpush2.msra.mxu0 0.0
        %961 = vmatprep.subr.mxu0 0.0
        %962 = vmatpush2.msra.mxu0 0.0
        %963 = vmatprep.mubr.f32.mxu0 0.0
        %964 = vmatmul.mubr.f32.gmra.mxu0 %v860
        %v965 = vpop.f32.mrf.mxu0
        %v966 = vadd.f32 %v897, %v965
        %v967 = vpop.f32.mrf.mxu0
        %968 = vmatprep.mubr.f32.mxu0 0.0
        %969 = vmatmul.mubr.f32.gmra.mxu0 %v861
        %v970 = vpop.f32.mrf.mxu0
        %v971 = vadd.f32 %v897, %v970
        %v972 = vpop.f32.mrf.mxu0
        %973 = vmatprep.mubr.f32.mxu0 0.0
        %974 = vmatmul.mubr.f32.gmra.mxu0 %v862
        %v975 = vpop.f32.mrf.mxu0
        %v976 = vadd.f32 %v897, %v975
        %v977 = vpop.f32.mrf.mxu0
        %978 = vmatprep.mubr.f32.mxu0 0.0
        %979 = vmatmul.mubr.f32.gmra.mxu0 %v863
        %v980 = vpop.f32.mrf.mxu0
        %v981 = vadd.f32 %v897, %v980
        %v982 = vpop.f32.mrf.mxu0
        %983 = vmatprep.mubr.f32.mxu0 0.0
        %984 = vmatmul.mubr.f32.gmra.mxu0 %v864
        %v985 = vpop.f32.mrf.mxu0
        %v986 = vadd.f32 %v897, %v985
        %v987 = vpop.f32.mrf.mxu0
        %988 = vmatprep.mubr.f32.mxu0 0.0
        %989 = vmatmul.mubr.f32.gmra.mxu0 %v865
        %v990 = vpop.f32.mrf.mxu0
        %v991 = vadd.f32 %v897, %v990
        %v992 = vpop.f32.mrf.mxu0
        %993 = vmatprep.mubr.f32.mxu0 0.0
        %994 = vmatmul.mubr.f32.gmra.mxu0 %v866
        %v995 = vpop.f32.mrf.mxu0
        %v996 = vadd.f32 %v897, %v995
        %v997 = vpop.f32.mrf.mxu0
        %998 = vmatprep.mubr.f32.mxu0 0.0
        %999 = vmatmul.mubr.f32.gmra.mxu0 %v867
        %v1000 = vpop.f32.mrf.mxu0
        %v1001 = vadd.f32 %v897, %v1000
        %v1002 = vpop.f32.mrf.mxu0
        %1003 = vmatprep.mubr.f32.mxu0 0.0
        %1004 = vmatmul.mubr.f32.gmra.mxu0 %v868
        %v1005 = vpop.f32.mrf.mxu0
        %v1006 = vadd.f32 %v897, %v1005
        %v1007 = vpop.f32.mrf.mxu0
        %1008 = vmatprep.mubr.f32.mxu0 0.0
        %1009 = vmatmul.mubr.f32.gmra.mxu0 %v869
        %v1010 = vpop.f32.mrf.mxu0
        %v1011 = vadd.f32 %v897, %v1010
        %v1012 = vpop.f32.mrf.mxu0
        %1013 = vmatprep.mubr.f32.mxu0 0.0
        %1014 = vmatmul.mubr.f32.gmra.mxu0 %v870
        %v1015 = vpop.f32.mrf.mxu0
        %v1016 = vadd.f32 %v897, %v1015
        %v1017 = vpop.f32.mrf.mxu0
        %1018 = vmatprep.mubr.f32.mxu0 0.0
        %1019 = vmatmul.mubr.f32.gmra.mxu0 %v871
        %v1020 = vpop.f32.mrf.mxu0
        %v1021 = vadd.f32 %v897, %v1020
        %v1022 = vpop.f32.mrf.mxu0
        %1023 = vmatprep.mubr.f32.mxu0 0.0
        %1024 = vmatmul.mubr.f32.gmra.mxu0 %v872
        %v1025 = vpop.f32.mrf.mxu0
        %v1026 = vadd.f32 %v897, %v1025
        %v1027 = vpop.f32.mrf.mxu0
        %1028 = vmatprep.mubr.f32.mxu0 0.0
        %1029 = vmatmul.mubr.f32.gmra.mxu0 %v873
        %v1030 = vpop.f32.mrf.mxu0
        %v1031 = vadd.f32 %v897, %v1030
        %v1032 = vpop.f32.mrf.mxu0
        %1033 = vmatprep.mubr.f32.mxu0 0.0
        %1034 = vmatmul.mubr.f32.gmra.mxu0 %v874
        %v1035 = vpop.f32.mrf.mxu0
        %v1036 = vadd.f32 %v897, %v1035
        %v1037 = vpop.f32.mrf.mxu0
        %1038 = vmatprep.mubr.f32.mxu0 0.0
        %1039 = vmatmul.mubr.f32.gmra.mxu0 %v875
        %v1040 = vpop.f32.mrf.mxu0
        %v1041 = vadd.f32 %v897, %v1040
        %v1042 = vpop.f32.mrf.mxu0
        %1043 = vdwg.mxu0
        %1044 = vmax.xlane.f32.xlu0 %v966
        %v1045 = vpop.xlane.xlu0 %1044
        %1046 = vmax.xlane.f32.xlu0 %v971
        %v1047 = vpop.xlane.xlu0 %1046
        %1048 = vmax.xlane.f32.xlu0 %v976
        %v1049 = vpop.xlane.xlu0 %1048
        %1050 = vmax.xlane.f32.xlu0 %v981
        %v1051 = vpop.xlane.xlu0 %1050
        %1052 = vmax.xlane.f32.xlu0 %v986
        %v1053 = vpop.xlane.xlu0 %1052
        %1054 = vmax.xlane.f32.xlu0 %v991
        %v1055 = vpop.xlane.xlu0 %1054
        %1056 = vmax.xlane.f32.xlu0 %v996
        %v1057 = vpop.xlane.xlu0 %1056
        %1058 = vmax.xlane.f32.xlu0 %v1001
        %v1059 = vpop.xlane.xlu0 %1058
        %1060 = vmax.xlane.f32.xlu0 %v1006
        %v1061 = vpop.xlane.xlu0 %1060
        %1062 = vmax.xlane.f32.xlu0 %v1011
        %v1063 = vpop.xlane.xlu0 %1062
        %1064 = vmax.xlane.f32.xlu0 %v1016
        %v1065 = vpop.xlane.xlu0 %1064
        %1066 = vmax.xlane.f32.xlu0 %v1021
        %v1067 = vpop.xlane.xlu0 %1066
        %1068 = vmax.xlane.f32.xlu0 %v1026
        %v1069 = vpop.xlane.xlu0 %1068
        %1070 = vmax.xlane.f32.xlu0 %v1031
        %v1071 = vpop.xlane.xlu0 %1070
        %1072 = vmax.xlane.f32.xlu0 %v1036
        %v1073 = vpop.xlane.xlu0 %1072
        %1074 = vmax.xlane.f32.xlu0 %v1041
        %v1075 = vpop.xlane.xlu0 %1074
        %v1076 = vsub.f32 %v966, %v1045
        %v1077 = vsub.f32 %v971, %v1047
        %v1078 = vsub.f32 %v976, %v1049
        %v1079 = vsub.f32 %v981, %v1051
        %v1080 = vsub.f32 %v986, %v1053
        %v1081 = vsub.f32 %v991, %v1055
        %v1082 = vsub.f32 %v996, %v1057
        %v1083 = vsub.f32 %v1001, %v1059
        %v1084 = vsub.f32 %v1006, %v1061
        %v1085 = vsub.f32 %v1011, %v1063
        %v1086 = vsub.f32 %v1016, %v1065
        %v1087 = vsub.f32 %v1021, %v1067
        %v1088 = vsub.f32 %v1026, %v1069
        %v1089 = vsub.f32 %v1031, %v1071
        %v1090 = vsub.f32 %v1036, %v1073
        %v1091 = vsub.f32 %v1041, %v1075
        %v1092 = vmul.f32 %v1076, 1.442695
        %v1093 = vpow.pop %v1092
        %v1094 = vmul.f32 %v1077, 1.442695
        %v1095 = vpow.pop %v1094
        %v1096 = vmul.f32 %v1078, 1.442695
        %v1097 = vpow.pop %v1096
        %v1098 = vmul.f32 %v1079, 1.442695
        %v1099 = vpow.pop %v1098
        %v1100 = vmul.f32 %v1080, 1.442695
        %v1101 = vpow.pop %v1100
        %v1102 = vmul.f32 %v1081, 1.442695
        %v1103 = vpow.pop %v1102
        %v1104 = vmul.f32 %v1082, 1.442695
        %v1105 = vpow.pop %v1104
        %v1106 = vmul.f32 %v1083, 1.442695
        %v1107 = vpow.pop %v1106
        %v1108 = vmul.f32 %v1084, 1.442695
        %v1109 = vpow.pop %v1108
        %v1110 = vmul.f32 %v1085, 1.442695
        %v1111 = vpow.pop %v1110
        %v1112 = vmul.f32 %v1086, 1.442695
        %v1113 = vpow.pop %v1112
        %v1114 = vmul.f32 %v1087, 1.442695
        %v1115 = vpow.pop %v1114
        %v1116 = vmul.f32 %v1088, 1.442695
        %v1117 = vpow.pop %v1116
        %v1118 = vmul.f32 %v1089, 1.442695
        %v1119 = vpow.pop %v1118
        %v1120 = vmul.f32 %v1090, 1.442695
        %v1121 = vpow.pop %v1120
        %v1122 = vmul.f32 %v1091, 1.442695
        %v1123 = vpow.pop %v1122
        %1124 = vadd.xlane.f32.xlu0 %v1093
        %v1125 = vpop.xlane.xlu0 %1124
        %1126 = vadd.xlane.f32.xlu0 %v1095
        %v1127 = vpop.xlane.xlu0 %1126
        %1128 = vadd.xlane.f32.xlu0 %v1097
        %v1129 = vpop.xlane.xlu0 %1128
        %1130 = vadd.xlane.f32.xlu0 %v1099
        %v1131 = vpop.xlane.xlu0 %1130
        %1132 = vadd.xlane.f32.xlu0 %v1101
        %v1133 = vpop.xlane.xlu0 %1132
        %1134 = vadd.xlane.f32.xlu0 %v1103
        %v1135 = vpop.xlane.xlu0 %1134
        %1136 = vadd.xlane.f32.xlu0 %v1105
        %v1137 = vpop.xlane.xlu0 %1136
        %1138 = vadd.xlane.f32.xlu0 %v1107
        %v1139 = vpop.xlane.xlu0 %1138
        %1140 = vadd.xlane.f32.xlu0 %v1109
        %v1141 = vpop.xlane.xlu0 %1140
        %1142 = vadd.xlane.f32.xlu0 %v1111
        %v1143 = vpop.xlane.xlu0 %1142
        %1144 = vadd.xlane.f32.xlu0 %v1113
        %v1145 = vpop.xlane.xlu0 %1144
        %1146 = vadd.xlane.f32.xlu0 %v1115
        %v1147 = vpop.xlane.xlu0 %1146
        %1148 = vadd.xlane.f32.xlu0 %v1117
        %v1149 = vpop.xlane.xlu0 %1148
        %1150 = vadd.xlane.f32.xlu0 %v1119
        %v1151 = vpop.xlane.xlu0 %1150
        %1152 = vadd.xlane.f32.xlu0 %v1121
        %v1153 = vpop.xlane.xlu0 %1152
        %1154 = vadd.xlane.f32.xlu0 %v1123
        %v1155 = vpop.xlane.xlu0 %1154
        %v1156 = vlog2.pop %v1125
        %v1157 = vmul.f32 %v1156, 0.6931472
        %v1158 = vlog2.pop %v1127
        %v1159 = vmul.f32 %v1158, 0.6931472
        %v1160 = vlog2.pop %v1129
        %v1161 = vmul.f32 %v1160, 0.6931472
        %v1162 = vlog2.pop %v1131
        %v1163 = vmul.f32 %v1162, 0.6931472
        %v1164 = vlog2.pop %v1133
        %v1165 = vmul.f32 %v1164, 0.6931472
        %v1166 = vlog2.pop %v1135
        %v1167 = vmul.f32 %v1166, 0.6931472
        %v1168 = vlog2.pop %v1137
        %v1169 = vmul.f32 %v1168, 0.6931472
        %v1170 = vlog2.pop %v1139
        %v1171 = vmul.f32 %v1170, 0.6931472
        %v1172 = vlog2.pop %v1141
        %v1173 = vmul.f32 %v1172, 0.6931472
        %v1174 = vlog2.pop %v1143
        %v1175 = vmul.f32 %v1174, 0.6931472
        %v1176 = vlog2.pop %v1145
        %v1177 = vmul.f32 %v1176, 0.6931472
        %v1178 = vlog2.pop %v1147
        %v1179 = vmul.f32 %v1178, 0.6931472
        %v1180 = vlog2.pop %v1149
        %v1181 = vmul.f32 %v1180, 0.6931472
        %v1182 = vlog2.pop %v1151
        %v1183 = vmul.f32 %v1182, 0.6931472
        %v1184 = vlog2.pop %v1153
        %v1185 = vmul.f32 %v1184, 0.6931472
        %v1186 = vlog2.pop %v1155
        %v1187 = vmul.f32 %v1186, 0.6931472
        %v1188 = vsub.f32 %v1076, %v1157
        %v1189 = vsub.f32 %v1077, %v1159
        %v1190 = vsub.f32 %v1078, %v1161
        %v1191 = vsub.f32 %v1079, %v1163
        %v1192 = vsub.f32 %v1080, %v1165
        %v1193 = vsub.f32 %v1081, %v1167
        %v1194 = vsub.f32 %v1082, %v1169
        %v1195 = vsub.f32 %v1083, %v1171
        %v1196 = vsub.f32 %v1084, %v1173
        %v1197 = vsub.f32 %v1085, %v1175
        %v1198 = vsub.f32 %v1086, %v1177
        %v1199 = vsub.f32 %v1087, %v1179
        %v1200 = vsub.f32 %v1088, %v1181
        %v1201 = vsub.f32 %v1089, %v1183
        %v1202 = vsub.f32 %v1090, %v1185
        %v1203 = vsub.f32 %v1091, %v1187
        %1204 = vst [vmem:[%s218] sm:$0xff] %v1188
        %1205 = vst [vmem:[%s218 + $0x8] sm:$0xff] %v1189
        %1206 = vst [vmem:[%s218 + $0x10] sm:$0xff] %v1190
        %1207 = vst [vmem:[%s218 + $0x18] sm:$0xff] %v1191
        %1208 = vst [vmem:[%s218 + $0x20] sm:$0xff] %v1192
        %1209 = vst [vmem:[%s218 + $0x28] sm:$0xff] %v1193
        %1210 = vst [vmem:[%s218 + $0x30] sm:$0xff] %v1194
        %1211 = vst [vmem:[%s218 + $0x38] sm:$0xff] %v1195
        %1212 = vst [vmem:[%s218 + $0x40] sm:$0xff] %v1196
        %1213 = vst [vmem:[%s218 + $0x48] sm:$0xff] %v1197
        %1214 = vst [vmem:[%s218 + $0x50] sm:$0xff] %v1198
        %1215 = vst [vmem:[%s218 + $0x58] sm:$0xff] %v1199
        %1216 = vst [vmem:[%s218 + $0x60] sm:$0xff] %v1200
        %1217 = vst [vmem:[%s218 + $0x68] sm:$0xff] %v1201
        %1218 = vst [vmem:[%s218 + $0x70] sm:$0xff] %v1202
        %1219 = vst [vmem:[%s218 + $0x78] sm:$0xff] %v1203
        %s1220 = sand.u32 %s137, 1
        %s1221 = scalar_lea.sflag [#allocation3], %s1220
        %s1222 = sand.u32 %s137, 1
        %s1223 = smul.addr %s1222, 128
        %s1224 = scalar_lea.vmem [#allocation2], %s1223
        // Predicated region
        $region41: #{tpu_custom_call.1} parent=39 // pred_check
          %p1225 = pneg %p147
        $region42: #{tpu_custom_call.1} parent=39 // pred_check_branch
          %1227 = sbr.rel (%p1225) target = $region44
        $region43: #{tpu_custom_call.1} parent=39 // pred_region
          %s1228 = smul.u32 16, %s19
          %s1230 = ssub.s32 2048, 2048
          %1231 = vsyncadd %s1221, %s1230
          %s1232 = smul.addr %s1228, 128
          %s1233 = scalar_lea.hbm %s5, %s1232
          %s1234 = sshll.u32 %s1224, 4
          %s1235 = int_to_ptr.vmem [resolvable:$true] %s1234
          %1240 = dma.vmem_to_hbm [thread:$0]  %s1235, 2048, %s1233, %s1221, 128, 128, 8
        $region44: #{tpu_custom_call.1} parent=39 // pred_fallthru
          _
      $region40: #{tpu_custom_call.1} parent=5 // pred_fallthru
        _
      %p1241 = scmp.le.s32.totalorder 2, %s14
      // Predicated region
      $region45: #{tpu_custom_call.1} parent=5 // pred_check
        %p1242 = pneg %p1241
      $region46: #{tpu_custom_call.1} parent=5 // pred_check_branch
        %1244 = sbr.rel (%p1242) target = $region48
      $region47: #{tpu_custom_call.1} parent=5 // pred_region
        %s1245 = ssub.s32 %s14, 2
        // Predicated region
        $region49: #{tpu_custom_call.1} parent=47 // pred_check
          %p1246 = pneg %p153
        $region50: #{tpu_custom_call.1} parent=47 // pred_check_branch
          %1248 = sbr.rel (%p1246) target = $region52
        $region51: #{tpu_custom_call.1} parent=47 // pred_region
          %s1249 = sand.u32 %s138, 1
          %s1250 = scalar_lea.sflag [#allocation3], %s1249
          %s1251 = sand.u32 %s138, 1
          %s1252 = smul.addr %s1251, 128
          %s1253 = scalar_lea.vmem [#allocation2], %s1252
          %1254 = dma.done %s1250, 2048
        $region52: #{tpu_custom_call.1} parent=47 // pred_fallthru
          _
      $region48: #{tpu_custom_call.1} parent=5 // pred_fallthru
        _
    $region6: #{tpu_custom_call.1} parent=1 // loop_footer
      %s18 = sadd.s32 1, %s14
    $region7: #{tpu_custom_call.1} parent=1 // loop_footer_branch
      %13 = sbr.rel target = $region3
    $region8: #{tpu_custom_call.1} parent=1 // loop_exit
      _
    %1255 = vsyncpa [#allocation3], 1
    %s1256 = scalar_lea.sflag [#allocation3], 1
    %1257 = vsyncpa %s1256, 1

</llo_original>
